<compile_context>
chip_gen: v6e
topology: v6e:2x2x1
jax: 0.10.0
libtpu: 0.0.40
codegen_flags: <defaults>
</compile_context>

<pallas_src>
import functools
import math

import jax
import jax.numpy as jnp
from jax import lax
from jax.experimental import pallas as pl
from jax.experimental.pallas import tpu as pltpu

_HIGHEST = lax.Precision.HIGHEST


# ----------------------------------------------------------------------------
# VMEM capacity helper (generation-aware; safe fallback for interpret mode)
# ----------------------------------------------------------------------------
def _vmem_capacity_bytes():
    try:
        return int(pltpu.get_tpu_info().vmem_capacity_bytes)
    except Exception:
        return 64 * 1024 * 1024   # conservative (v7x-sized) fallback


# ----------------------------------------------------------------------------
# RelativePositionBias (plain-JAX glue: tiny (num_buckets, H) table gather)
# ----------------------------------------------------------------------------
def _relative_position_bucket_linear(relative_position, bidirectional, num_buckets):
    assert num_buckets > 0
    if bidirectional:
        mn = -(num_buckets // 2) - (num_buckets % 2 - 1)
        mx = num_buckets // 2
    else:
        mn = -num_buckets + 1
        mx = 0
    return jnp.clip(relative_position, mn, mx) - mn


def _relative_position_bucket_loglinear(relative_position, bidirectional, num_buckets,
                                        max_distance):
    ret = jnp.zeros_like(relative_position)
    n = -relative_position
    if bidirectional:
        num_buckets //= 2
        ret = ret + (n < 0).astype(relative_position.dtype) * num_buckets
        n = jnp.abs(n)
    else:
        n = jnp.maximum(n, 0)
    max_exact = num_buckets
    is_small = n < max_exact
    val_if_large = max_exact + (
        jnp.log(n.astype(jnp.float32) / max_exact)
        / math.log(max_distance / max_exact)
        * (num_buckets - max_exact)
    ).astype(relative_position.dtype)
    val_if_large = jnp.minimum(val_if_large, num_buckets - 1)
    return ret + jnp.where(is_small, n, val_if_large)


def compute_relative_position_bias(qlen, klen, bias_weight, *, bidirectional,
                                   num_buckets, loglinear,
                                   loglinear_max_distance=None):
    """(num_heads, qlen, klen) additive bias, matching RelativePositionBias.compute_bias."""
    context_position = jnp.arange(qlen, dtype=jnp.int32)[:, None]
    memory_position = jnp.arange(klen, dtype=jnp.int32)[None, :]
    relative_position = memory_position - context_position
    if loglinear:
        rp_bucket = _relative_position_bucket_loglinear(
            relative_position, bidirectional, num_buckets, loglinear_max_distance)
    else:
        rp_bucket = _relative_position_bucket_linear(
            relative_position, bidirectional, num_buckets)
    values = bias_weight[rp_bucket]                     # (qlen, klen, num_heads)
    return jnp.transpose(values, (2, 0, 1))             # (num_heads, qlen, klen)


# ----------------------------------------------------------------------------
# Kernel A: fused RMSNorm + QKV projection
# ----------------------------------------------------------------------------
def _rmsnorm_qkv_kernel(eps, x_ref, scale_ref, w_ref, out_ref, xn_ref):
    # Normalize the row tile once per row tile (column axis is innermost and
    # marked "arbitrary" so every core sees j==0 first for its rows).
    @pl.when(pl.program_id(1) == 0)
    def _():
        x = x_ref[...].astype(jnp.float32)                          # (TR, hidden)
        norm = jnp.sqrt(jnp.sum(x * x, axis=-1, keepdims=True))     # (TR, 1)
        rms = norm * (float(x.shape[-1]) ** -0.5)
        xn = (x / (rms + eps)) * scale_ref[...].astype(jnp.float32)
        xn_ref[...] = xn

    out_ref[...] = jnp.dot(
        xn_ref[...].astype(w_ref.dtype), w_ref[...],
        precision=_HIGHEST, preferred_element_type=jnp.float32).astype(out_ref.dtype)


def rmsnorm_qkv(x, scale, w_t, *, eps=1e-8, row_tile=256, col_tile=512):
    """y = RMSNorm(x) @ w_t (fused).  x: (N, hidden), scale: (hidden,), w_t: (hidden, out_dim)."""
    n_rows, hidden = x.shape
    out_dim = w_t.shape[1]
    tr = min(row_tile, n_rows)
    tc = min(col_tile, out_dim)
    grid = (pl.cdiv(n_rows, tr), pl.cdiv(out_dim, tc))
    vmem_cap = _vmem_capacity_bytes()
    return pl.pallas_call(
        functools.partial(_rmsnorm_qkv_kernel, eps),
        out_shape=jax.ShapeDtypeStruct((n_rows, out_dim), x.dtype),
        grid_spec=pltpu.PrefetchScalarGridSpec(
            num_scalar_prefetch=0,
            grid=grid,
            in_specs=[
                pl.BlockSpec((tr, hidden), lambda i, j: (i, 0)),   # x rows (re-used across j)
                pl.BlockSpec((1, hidden), lambda i, j: (0, 0)),    # RMSNorm scale (resident)
                pl.BlockSpec((hidden, tc), lambda i, j: (0, j)),   # W^T column panel
            ],
            out_specs=pl.BlockSpec((tr, tc), lambda i, j: (i, j)),
            scratch_shapes=[pltpu.VMEM((tr, hidden), jnp.float32)],
        ),
        compiler_params=pltpu.CompilerParams(
            # column axis "arbitrary" so the normalized-row scratch is valid
            # (j==0 always runs before j>0 on whichever core owns the row tile).
            dimension_semantics=("parallel", "arbitrary"),
            vmem_limit_bytes=min(int(vmem_cap * 3 // 4), 100 * 1024 * 1024)),
    )(x, scale.reshape(1, hidden), w_t)


# ----------------------------------------------------------------------------
# Kernel B: head-fused attention core (+ output projection and residual add)
# ----------------------------------------------------------------------------
def _attention_kernel(num_heads, head_dim, with_scores,
                      qkv_ref, mask_ref, bias_ref, w_ref, res_ref, *refs):
    if with_scores:
        out_ref, scores_ref, ctx_ref = refs
    else:
        out_ref, ctx_ref = refs
        scores_ref = None

    H, D = num_heads, head_dim
    qkv_size = H * D

    # key-padding mask, built in-kernel from the 0/1 key row
    # (matches _prepare_attention_mask_for_broadcast: (1 - m) * -10000).
    mask_add = (1.0 - mask_ref[...].astype(jnp.float32)) * (-10000.0)   # (Bt, 1, Lk)

    # Per-head attention; head loop is a static unroll (H is small in RETRO).
    for h in range(H):
        q = qkv_ref[:, :, h * D:(h + 1) * D]                     # (Bt, Lq, D)
        k = qkv_ref[:, :, qkv_size + h * D:qkv_size + (h + 1) * D]
        v = qkv_ref[:, :, 2 * qkv_size + h * D:2 * qkv_size + (h + 1) * D]

        # scores = q @ k^T : batch dim 0, contract head_dim vs head_dim (no .T).
        s = lax.dot_general(q, k, (((2,), (2,)), ((0,), (0,))),
                            precision=_HIGHEST,
                            preferred_element_type=jnp.float32)   # (Bt, Lq, Lk)
        s = s + bias_ref[h].astype(jnp.float32)[None]             # rel-pos bias (f32)
        s = s + mask_add

        # numerically-stable softmax over keys (exact divide for accuracy).
        mx = jnp.max(s, axis=-1, keepdims=True)
        e = jnp.exp(s - mx)
        p = e / jnp.sum(e, axis=-1, keepdims=True)
        # TODO(synk): attn_dropout / resid_dropout are identity here (inference / eval).

        if with_scores:
            scores_ref[:, h] = p.astype(scores_ref.dtype)

        ctx = lax.dot_general(p.astype(v.dtype), v, (((2,), (1,)), ((0,), (0,))),
                              precision=_HIGHEST,
                              preferred_element_type=jnp.float32)  # (Bt, Lq, D)
        # stash head context at its '(h d)' column offset in the scratch.
        ctx_ref[:, :, h * D:(h + 1) * D] = ctx

    # ONE full-depth output projection: (Bt, Lq, H*D) @ (H*D, hidden), + residual.
    ctx_all = ctx_ref[...]
    proj = lax.dot_general(ctx_all.astype(w_ref.dtype), w_ref[...],
                           (((2,), (0,)), ((), ())),
                           precision=_HIGHEST,
                           preferred_element_type=jnp.float32)     # (Bt, Lq, hidden)
    out_ref[...] = (proj + res_ref[...].astype(jnp.float32)).astype(out_ref.dtype)


def _choose_batch_tile(B, H, L, D, hidden, with_scores, budget_bytes, max_tile=64):
    """Largest divisor of B (capped) whose per-step VMEM footprint fits the budget."""
    resident = 2 * (H * L * L * 4 + H * D * hidden * 4)   # rel-bias + W^T (possibly 2 bufs)

    def footprint(bt):
        qkv_blk = bt * L * 3 * H * D * 4
        mask_blk = bt * L * 4
        res_blk = bt * L * hidden * 4
        out_blk = bt * L * hidden * 4
        sc_blk = bt * H * L * L * 4 if with_scores else 0
        pipelined = 2 * (qkv_blk + mask_blk + res_blk + out_blk + sc_blk)
        scratch = bt * L * H * D * 4
        work = 4 * bt * L * L * 4                          # s / e / p f32 temporaries
        return resident + pipelined + scratch + work

    best = 1
    for cand in range(1, min(B, max_tile) + 1):
        if B % cand == 0 and footprint(cand) <= budget_bytes:
            best = cand
    return best


def fused_attention(qkv, key_mask, rel_bias, w_t, residual, *, num_heads, head_dim,
                    return_scores=True, batch_tile=None):
    """RETRO MultiHeadAttention core (use_cache=False path), head-fused, with the
    final projection and residual add fused in.

      qkv      : (B, L, 3*H*D) flat QKV (q | k | v column blocks, '(h d)' inner)
      key_mask : (B, 1, L) 0/1 mask over keys (1 = attend)
      rel_bias : (H, L, L) additive relative-position bias (f32)
      w_t      : (H*D, hidden) == final_proj.weight.T
      residual : (B, L, hidden)

    Returns (out, scores); scores is None when return_scores=False.
    """
    B, L, qkv3 = qkv.shape
    H, D = num_heads, head_dim
    hidden = w_t.shape[1]
    assert qkv3 == 3 * H * D
    assert w_t.shape[0] == H * D
    assert rel_bias.shape == (H, L, L)
    assert key_mask.shape == (B, 1, L)
    assert residual.shape == (B, L, hidden)

    vmem_cap = _vmem_capacity_bytes()
    if batch_tile is None:
        batch_tile = _choose_batch_tile(B, H, L, D, hidden, return_scores,
                                        budget_bytes=vmem_cap // 2)
    assert B % batch_tile == 0
    num_b_tiles = B // batch_tile

    out_shape = [jax.ShapeDtypeStruct((B, L, hidden), qkv.dtype)]
    out_specs = [pl.BlockSpec((batch_tile, L, hidden), lambda b: (b, 0, 0))]
    if return_scores:
        # NOTE: production paths should use return_scores=False — the (B,H,L,L)
        # scores write dominates HBM traffic when enabled.
        out_shape.append(jax.ShapeDtypeStruct((B, H, L, L), qkv.dtype))
        out_specs.append(pl.BlockSpec((batch_tile, H, L, L), lambda b: (b, 0, 0, 0)))

    results = pl.pallas_call(
        functools.partial(_attention_kernel, H, D, return_scores),
        out_shape=tuple(out_shape),
        grid_spec=pltpu.PrefetchScalarGridSpec(
            num_scalar_prefetch=0,
            grid=(num_b_tiles,),                 # heads fused into the kernel body
            in_specs=[
                pl.BlockSpec((batch_tile, L, 3 * H * D), lambda b: (b, 0, 0)),  # flat qkv
                pl.BlockSpec((batch_tile, 1, L), lambda b: (b, 0, 0)),          # 0/1 key mask
                pl.BlockSpec((H, L, L), lambda b: (0, 0, 0)),                   # rel bias, resident
                pl.BlockSpec((H * D, hidden), lambda b: (0, 0)),                # W^T, resident
                pl.BlockSpec((batch_tile, L, hidden), lambda b: (b, 0, 0)),     # residual
            ],
            out_specs=tuple(out_specs),
            scratch_shapes=[pltpu.VMEM((batch_tile, L, H * D), jnp.float32)],
        ),
        compiler_params=pltpu.CompilerParams(
            dimension_semantics=("parallel",),   # batch axis shards across TCs (v7x)
            vmem_limit_bytes=min(int(vmem_cap * 3 // 4), 100 * 1024 * 1024)),
    )(qkv, key_mask, rel_bias, w_t, residual)

    if return_scores:
        out, scores = results
        return out, scores
    return results[0], None


# ----------------------------------------------------------------------------
# Full RetroEncoderSelfAttention forward
# ----------------------------------------------------------------------------
def retro_encoder_self_attention(x, attention_mask, params, *, num_heads,
                                 pos_bias_num_buckets, eps=1e-8, batch_tile=None,
                                 return_scores=True):
    """x: (b, l, k, r, hidden); attention_mask: (b, l, k, r) with 1=keep, 0=pad.
    Returns (output, attention_scores) shaped like the PyTorch module."""
    b, l, kn, r, hidden = x.shape
    w_qkv = params["qkv_weight"]            # (3*qkv_size, hidden)
    w_out = params["final_proj_weight"]     # (hidden, qkv_size)
    qkv_size = w_qkv.shape[0] // 3
    H = num_heads
    D = qkv_size // H
    assert H * D == qkv_size and w_out.shape == (hidden, qkv_size)

    # --- RMSNorm + QKV projection (fused Pallas kernel) ---
    n_rows = b * l * kn * r
    qkv = rmsnorm_qkv(x.reshape(n_rows, hidden), params["ln_scale"], w_qkv.T, eps=eps)

    # --- no transpose between kernels: kernel B consumes the flat qkv directly,
    #     slicing q/k/v head panels by column offset in-kernel.
    B = b * l * kn
    qkv = qkv.reshape(B, r, 3 * qkv_size)

    key_mask = attention_mask.reshape(B, 1, r).astype(x.dtype)
    residual = x.reshape(B, r, hidden)

    # --- relative position bias (tiny table gather; kept in f32 for accuracy) ---
    rel_bias = compute_relative_position_bias(
        r, r, params["rel_bias_weight"], bidirectional=True,
        num_buckets=pos_bias_num_buckets, loglinear=False).astype(jnp.float32)

    out, scores = fused_attention(
        qkv, key_mask, rel_bias, w_out.T, residual,
        num_heads=H, head_dim=D, return_scores=return_scores, batch_tile=batch_tile)

    output = out.reshape(b, l, kn, r, hidden)
    if scores is not None:
        scores = scores.reshape(b, l, kn, H, r, r)
    return output, scores


# ----------------------------------------------------------------------------
# Pure-JAX reference (mirrors the PyTorch module) for correctness check
# ----------------------------------------------------------------------------
def reference_forward(x, attention_mask, params, *, num_heads, pos_bias_num_buckets,
                      eps=1e-8):
    hidden = x.shape[-1]
    w_qkv = params["qkv_weight"]
    w_out = params["final_proj_weight"]
    qkv_size = w_qkv.shape[0] // 3
    H = num_heads
    D = qkv_size // H
    residual = x

    norm = jnp.sqrt(jnp.sum(x * x, axis=-1, keepdims=True))
    rms = norm * (hidden ** -0.5)
    xn = (x / (rms + eps)) * params["ln_scale"]

    qkv = jnp.matmul(xn, w_qkv.T, precision=_HIGHEST)
    q, k, v = jnp.split(qkv, 3, axis=-1)

    def heads(t):
        t = t.reshape(*t.shape[:-1], H, D)       # (..., r, H, D)
        return jnp.moveaxis(t, -2, -3)           # (..., H, r, D)

    q, k, v = heads(q), heads(k), heads(v)

    mask = (1.0 - attention_mask)[..., None, None, :] * -10000.0      # (b,l,k,1,1,r)
    s = jnp.einsum('...hqd,...hkd->...hqk', q, k, precision=_HIGHEST)
    rel = compute_relative_position_bias(
        s.shape[-2], s.shape[-1], params["rel_bias_weight"], bidirectional=True,
        num_buckets=pos_bias_num_buckets, loglinear=False)
    s = s + rel + mask
    p = jax.nn.softmax(s, axis=-1)
    ctx = jnp.einsum('...hqk,...hkd->...hqd', p, v, precision=_HIGHEST)
    ctx = jnp.moveaxis(ctx, -3, -2)
    ctx = ctx.reshape(*ctx.shape[:-2], H * D)
    out = jnp.matmul(ctx, w_out.T, precision=_HIGHEST) + residual
    return out, p


if __name__ == "__main__":
    # Small shapes: x is (b, l, k, r, hidden) as in the RETRO encoder.
    b, l, kn, r = 2, 2, 2, 8
    hidden = 32
    num_heads = 4
    qkv_size = 32            # head_dim = 8
    num_buckets = 8

    key = jax.random.PRNGKey(0)
    kx, kq, kw, kb, ks = jax.random.split(key, 5)

    x = jax.random.normal(kx, (b, l, kn, r, hidden), dtype=jnp.float32)

    # 0/1 key mask (1 = attend); mask the last 3 tokens of retrieved neighbor 1.
    attention_mask = jnp.ones((b, l, kn, r), dtype=jnp.float32)
    attention_mask = attention_mask.at[:, :, 1, r - 3:].set(0.0)

    params = dict(
        ln_scale=1.0 + 0.1 * jax.random.normal(ks, (hidden,), dtype=jnp.float32),
        qkv_weight=(1.0 / math.sqrt(hidden)) * jax.random.normal(
            kq, (3 * qkv_size, hidden), dtype=jnp.float32),
        final_proj_weight=(1.0 / math.sqrt(qkv_size)) * jax.random.normal(
            kw, (hidden, qkv_size), dtype=jnp.float32),
        # NOTE: the PyTorch module zero-inits this embedding; small deterministic
        # random values are used so the bias path is exercised.
        rel_bias_weight=0.02 * jax.random.normal(
            kb, (num_buckets, num_heads), dtype=jnp.float32),
    )

    out, scores = retro_encoder_self_attention(
        x, attention_mask, params,
        num_heads=num_heads, pos_bias_num_buckets=num_buckets)
    out = jax.block_until_ready(out)
    scores = jax.block_until_ready(scores)

    ref_out, ref_scores = reference_forward(
        x, attention_mask, params,
        num_heads=num_heads, pos_bias_num_buckets=num_buckets)

    assert out.shape == (b, l, kn, r, hidden)
    assert scores.shape == (b, l, kn, num_heads, r, r)
    assert jnp.allclose(out, ref_out, rtol=2e-3, atol=2e-3), \
        float(jnp.max(jnp.abs(out - ref_out)))
    assert jnp.allclose(scores, ref_scores, rtol=2e-3, atol=2e-3), \
        float(jnp.max(jnp.abs(scores - ref_scores)))

    print("KERNEL_OK")
</pallas_src>

<mosaic_0001>
module attributes {stable_mosaic.version = 11 : i64} {
  func.func @_rmsnorm_qkv_kernel(%arg0: i32, %arg1: i32, %arg2: memref<64x32xf32, #tpu.memory_space<vmem>>, %arg3: memref<1x32xf32, #tpu.memory_space<vmem>>, %arg4: memref<32x96xf32, #tpu.memory_space<vmem>>, %arg5: memref<64x96xf32, #tpu.memory_space<vmem>>, %arg6: memref<64x32xf32, #tpu.memory_space<vmem>>) attributes {dimension_semantics = [#tpu.dimension_semantics<parallel>, #tpu.dimension_semantics<arbitrary>], iteration_bounds = array<i64: 1, 1>, scalar_prefetch = 0 : i64, scratch_operands = 1 : i64, tpu.core_type = #tpu.core_type<tc>, window_params = [{transform_indices = @transform_0, window_bounds = array<i64: 64, 32>}, {pipeline_mode = #tpu.pipeline_mode<synchronous>, transform_indices = @transform_1, window_bounds = array<i64: 1, 32>}, {transform_indices = @transform_2, window_bounds = array<i64: 32, 96>}, {transform_indices = @transform_3, window_bounds = array<i64: 64, 96>}]} {
    %c0_i32 = arith.constant 0 : i32
    %0 = arith.cmpi eq, %arg1, %c0_i32 : i32
    %1 = arith.extui %0 : i1 to i32
    %c0_i32_0 = arith.constant 0 : i32
    %2 = arith.cmpi ne, %1, %c0_i32_0 : i32
    scf.if %2 {
      %c0_6 = arith.constant 0 : index
      %c0_7 = arith.constant 0 : index
      %7 = vector.load %arg2[%c0_6, %c0_7] : memref<64x32xf32, #tpu.memory_space<vmem>>, vector<64x32xf32>
      %8 = arith.mulf %7, %7 : vector<64x32xf32>
      %cst_8 = arith.constant dense<0.000000e+00> : vector<64xf32>
      %9 = vector.multi_reduction <add>, %8, %cst_8 [1] : vector<64x32xf32> to vector<64xf32>
      %10 = vector.shape_cast %9 : vector<64xf32> to vector<64x1xf32>
      %11 = math.sqrt %10 : vector<64x1xf32>
      %cst_9 = arith.constant 0.176776692 : f32
      %12 = vector.broadcast %cst_9 : f32 to vector<64x1xf32>
      %13 = arith.mulf %11, %12 : vector<64x1xf32>
      %cst_10 = arith.constant 9.99999993E-9 : f32
      %14 = vector.broadcast %cst_10 : f32 to vector<64x1xf32>
      %15 = arith.addf %13, %14 : vector<64x1xf32>
      %16 = vector.broadcast %15 : vector<64x1xf32> to vector<64x32xf32>
      %17 = arith.divf %7, %16 : vector<64x32xf32>
      %c0_11 = arith.constant 0 : index
      %c0_12 = arith.constant 0 : index
      %18 = vector.load %arg3[%c0_11, %c0_12] : memref<1x32xf32, #tpu.memory_space<vmem>>, vector<1x32xf32>
      %19 = vector.broadcast %18 : vector<1x32xf32> to vector<64x32xf32>
      %20 = arith.mulf %17, %19 : vector<64x32xf32>
      %c0_13 = arith.constant 0 : index
      %c0_14 = arith.constant 0 : index
      %21 = vector.load %arg6[%c0_13, %c0_14] : memref<64x32xf32, #tpu.memory_space<vmem>>, vector<64x32xf32>
      tpu.vector_store %arg6[%c0_13, %c0_14], %20 {strides = array<i32>} : memref<64x32xf32, #tpu.memory_space<vmem>>, vector<64x32xf32>,
    } else {
    }
    %c0 = arith.constant 0 : index
    %c0_1 = arith.constant 0 : index
    %3 = vector.load %arg6[%c0, %c0_1] : memref<64x32xf32, #tpu.memory_space<vmem>>, vector<64x32xf32>
    %c0_2 = arith.constant 0 : index
    %c0_3 = arith.constant 0 : index
    %4 = vector.load %arg4[%c0_2, %c0_3] : memref<32x96xf32, #tpu.memory_space<vmem>>, vector<32x96xf32>
    %cst = arith.constant dense<0.000000e+00> : vector<64x96xf32>
    %5 = tpu.matmul %3, %4, %cst {dimension_numbers = #tpu.dot_dimension_numbers<[1], [0], [0], [1], [0, 0, 1, 1], [], []>, precision = #tpu.contract_precision<fp32>} : vector<64x32xf32>, vector<32x96xf32>, vector<64x96xf32> -> vector<64x96xf32>
    %c0_4 = arith.constant 0 : index
    %c0_5 = arith.constant 0 : index
    %6 = vector.load %arg5[%c0_4, %c0_5] : memref<64x96xf32, #tpu.memory_space<vmem>>, vector<64x96xf32>
    tpu.vector_store %arg5[%c0_4, %c0_5], %5 {strides = array<i32>} : memref<64x96xf32, #tpu.memory_space<vmem>>, vector<64x96xf32>,
    return
  }
  func.func @transform_0(%arg0: i32, %arg1: i32) -> (i32, i32) {
    %c0_i32 = arith.constant 0 : i32
    %c0_i32_0 = arith.constant 0 : i32
    return %arg0, %c0_i32 : i32, i32
  }
  func.func @transform_1(%arg0: i32, %arg1: i32) -> (i32, i32) {
    %c0_i32 = arith.constant 0 : i32
    %c0_i32_0 = arith.constant 0 : i32
    %c0_i32_1 = arith.constant 0 : i32
    return %c0_i32, %c0_i32_0 : i32, i32
  }
  func.func @transform_2(%arg0: i32, %arg1: i32) -> (i32, i32) {
    %c0_i32 = arith.constant 0 : i32
    %c0_i32_0 = arith.constant 0 : i32
    return %c0_i32, %arg1 : i32, i32
  }
  func.func @transform_3(%arg0: i32, %arg1: i32) -> (i32, i32) {
    %c0_i32 = arith.constant 0 : i32
    return %arg0, %arg1 : i32, i32
  }
}

</mosaic_0001>

<llo_original>
// kernel: tpu_custom_call.1
$region0: #{tpu_custom_call.1}
  #allocation0 [shape = 'u32[]', space=smem, size = 0x4, offset = 0x4, fixed_abs, tag = 'smem constant byte address 0x4 - core index']
  #allocation1 [shape = 'u32[144,128]{1,0:T(1,128)}', space=vmem, size = 0x12000, scoped, tag = 'internal scratch']
  #allocation2 [shape = 'f32[64,32]{1,0:T(8,128)}', space=vmem, size = 0x8000, scoped, tag = 'scratch operand']
  %s0 = inlined_call_operand.vmem [shape: f32[64,32], index: 0, kind: input, shape index: {}]
  %s1 = inlined_call_operand.vmem [shape: f32[1,32], index: 1, kind: input, shape index: {}]
  %s2 = inlined_call_operand.vmem [shape: f32[32,96], index: 2, kind: input, shape index: {}]
  %s3 = inlined_call_operand.hbm [shape: f32[64,96], index: 3, kind: output, shape index: {}]
  %s4 = sld [smem:[#allocation0]]
  $region26: #{tpu_custom_call.1} parent=0
    _
  %s6 = ssub.s32 1, %s4
  %s7 = scalar_select 0, %s6, %s4
  $region1: #{tpu_custom_call.1} parent=0
    #allocation3 [shape = 'u8[32768]{0}', space=vmem, size = 0x8000, scoped, tag = 'output window, operand 0, single buffered']
    #allocation4 [shape = 's32[1]{0}', space=sflag, size = 0x4, scoped, tag = 'scoped memory for tpu_custom_call.1']
    %8 = vsyncpa [#allocation4], 0
    // Predicated region
    $region2: #{tpu_custom_call.1} parent=1 // pred_check
      _
    $region3: #{tpu_custom_call.1} parent=1 // pred_check_branch
      %10 = sbr.rel (0) target = $region5
    $region4: #{tpu_custom_call.1} parent=1 // pred_region
      _
    $region5: #{tpu_custom_call.1} parent=1 // pred_fallthru
      _
    // Predicated region
    $region6: #{tpu_custom_call.1} parent=1 // pred_check
      _
    $region7: #{tpu_custom_call.1} parent=1 // pred_check_branch
      %12 = sbr.rel (0) target = $region9
    $region8: #{tpu_custom_call.1} parent=1 // pred_region
      _
    $region9: #{tpu_custom_call.1} parent=1 // pred_fallthru
      _
    // Predicated region
    $region10: #{tpu_custom_call.1} parent=1 // pred_check
      _
    $region11: #{tpu_custom_call.1} parent=1 // pred_check_branch
      %14 = sbr.rel (0) target = $region13
    $region12: #{tpu_custom_call.1} parent=1 // pred_region
      _
    $region13: #{tpu_custom_call.1} parent=1 // pred_fallthru
      _
    %p15 = scmp.eq.s32.totalorder 0, 0
    // Predicated region
    $region14: #{tpu_custom_call.1} parent=1 // pred_check
      %p16 = pneg %p15
    $region15: #{tpu_custom_call.1} parent=1 // pred_check_branch
      %18 = sbr.rel (%p16) target = $region17
    $region16: #{tpu_custom_call.1} parent=1 // pred_region
      %v19 = vld [vmem:[%s0] sm:$0xff]
      %v20 = vld [vmem:[%s0 + $0x8] sm:$0xff]
      %v21 = vld [vmem:[%s0 + $0x10] sm:$0xff]
      %v22 = vld [vmem:[%s0 + $0x18] sm:$0xff]
      %v23 = vld [vmem:[%s0 + $0x20] sm:$0xff]
      %v24 = vld [vmem:[%s0 + $0x28] sm:$0xff]
      %v25 = vld [vmem:[%s0 + $0x30] sm:$0xff]
      %v26 = vld [vmem:[%s0 + $0x38] sm:$0xff]
      %v27 = vmul.f32 %v19, %v19
      %v28 = vmul.f32 %v20, %v20
      %v29 = vmul.f32 %v21, %v21
      %v30 = vmul.f32 %v22, %v22
      %v31 = vmul.f32 %v23, %v23
      %v32 = vmul.f32 %v24, %v24
      %v33 = vmul.f32 %v25, %v25
      %v34 = vmul.f32 %v26, %v26
      %vm35 = vcmask 261120
      %v36 = vsel %vm35, %v27, 0.0
      %37 = vadd.xlane.f32.xlu0 %v36
      %v38 = vpop.xlane.xlu0 %37
      %v39 = vsel %vm35, %v28, 0.0
      %40 = vadd.xlane.f32.xlu0 %v39
      %v41 = vpop.xlane.xlu0 %40
      %v42 = vsel %vm35, %v29, 0.0
      %43 = vadd.xlane.f32.xlu0 %v42
      %v44 = vpop.xlane.xlu0 %43
      %v45 = vsel %vm35, %v30, 0.0
      %46 = vadd.xlane.f32.xlu0 %v45
      %v47 = vpop.xlane.xlu0 %46
      %v48 = vsel %vm35, %v31, 0.0
      %49 = vadd.xlane.f32.xlu0 %v48
      %v50 = vpop.xlane.xlu0 %49
      %v51 = vsel %vm35, %v32, 0.0
      %52 = vadd.xlane.f32.xlu0 %v51
      %v53 = vpop.xlane.xlu0 %52
      %v54 = vsel %vm35, %v33, 0.0
      %55 = vadd.xlane.f32.xlu0 %v54
      %v56 = vpop.xlane.xlu0 %55
      %v57 = vsel %vm35, %v34, 0.0
      %58 = vadd.xlane.f32.xlu0 %v57
      %v59 = vpop.xlane.xlu0 %58
      %v60 = vrsqrt.pop %v38
      %v61 = vmul.f32 %v38, %v60
      %vm62 = vcmp.eq.f32.partialorder %v38, inf
      %v63 = vsel %vm62, %v38, %v61
      %vm64 = vcmp.eq.f32.partialorder %v38, 0.0
      %v65 = vand.u32 %v38, 2147483648
      %v66 = vsel %vm64, %v65, %v63
      %v67 = vrsqrt.pop %v41
      %v68 = vmul.f32 %v41, %v67
      %vm69 = vcmp.eq.f32.partialorder %v41, inf
      %v70 = vsel %vm69, %v41, %v68
      %vm71 = vcmp.eq.f32.partialorder %v41, 0.0
      %v72 = vand.u32 %v41, 2147483648
      %v73 = vsel %vm71, %v72, %v70
      %v74 = vrsqrt.pop %v44
      %v75 = vmul.f32 %v44, %v74
      %vm76 = vcmp.eq.f32.partialorder %v44, inf
      %v77 = vsel %vm76, %v44, %v75
      %vm78 = vcmp.eq.f32.partialorder %v44, 0.0
      %v79 = vand.u32 %v44, 2147483648
      %v80 = vsel %vm78, %v79, %v77
      %v81 = vrsqrt.pop %v47
      %v82 = vmul.f32 %v47, %v81
      %vm83 = vcmp.eq.f32.partialorder %v47, inf
      %v84 = vsel %vm83, %v47, %v82
      %vm85 = vcmp.eq.f32.partialorder %v47, 0.0
      %v86 = vand.u32 %v47, 2147483648
      %v87 = vsel %vm85, %v86, %v84
      %v88 = vrsqrt.pop %v50
      %v89 = vmul.f32 %v50, %v88
      %vm90 = vcmp.eq.f32.partialorder %v50, inf
      %v91 = vsel %vm90, %v50, %v89
      %vm92 = vcmp.eq.f32.partialorder %v50, 0.0
      %v93 = vand.u32 %v50, 2147483648
      %v94 = vsel %vm92, %v93, %v91
      %v95 = vrsqrt.pop %v53
      %v96 = vmul.f32 %v53, %v95
      %vm97 = vcmp.eq.f32.partialorder %v53, inf
      %v98 = vsel %vm97, %v53, %v96
      %vm99 = vcmp.eq.f32.partialorder %v53, 0.0
      %v100 = vand.u32 %v53, 2147483648
      %v101 = vsel %vm99, %v100, %v98
      %v102 = vrsqrt.pop %v56
      %v103 = vmul.f32 %v56, %v102
      %vm104 = vcmp.eq.f32.partialorder %v56, inf
      %v105 = vsel %vm104, %v56, %v103
      %vm106 = vcmp.eq.f32.partialorder %v56, 0.0
      %v107 = vand.u32 %v56, 2147483648
      %v108 = vsel %vm106, %v107, %v105
      %v109 = vrsqrt.pop %v59
      %v110 = vmul.f32 %v59, %v109
      %vm111 = vcmp.eq.f32.partialorder %v59, inf
      %v112 = vsel %vm111, %v59, %v110
      %vm113 = vcmp.eq.f32.partialorder %v59, 0.0
      %v114 = vand.u32 %v59, 2147483648
      %v115 = vsel %vm113, %v114, %v112
      %v116 = vmul.f32 %v66, 0.17677669
      %v117 = vmul.f32 %v73, 0.17677669
      %v118 = vmul.f32 %v80, 0.17677669
      %v119 = vmul.f32 %v87, 0.17677669
      %v120 = vmul.f32 %v94, 0.17677669
      %v121 = vmul.f32 %v101, 0.17677669
      %v122 = vmul.f32 %v108, 0.17677669
      %v123 = vmul.f32 %v115, 0.17677669
      %v124 = vadd.f32 %v116, 1e-08
      %v125 = vadd.f32 %v117, 1e-08
      %v126 = vadd.f32 %v118, 1e-08
      %v127 = vadd.f32 %v119, 1e-08
      %v128 = vadd.f32 %v120, 1e-08
      %v129 = vadd.f32 %v121, 1e-08
      %v130 = vadd.f32 %v122, 1e-08
      %v131 = vadd.f32 %v123, 1e-08
      %v132 = vrcp.pop %v124
      %v133 = vmul.f32 %v19, %v132
      %v134 = vrcp.pop %v125
      %v135 = vmul.f32 %v20, %v134
      %v136 = vrcp.pop %v126
      %v137 = vmul.f32 %v21, %v136
      %v138 = vrcp.pop %v127
      %v139 = vmul.f32 %v22, %v138
      %v140 = vrcp.pop %v128
      %v141 = vmul.f32 %v23, %v140
      %v142 = vrcp.pop %v129
      %v143 = vmul.f32 %v24, %v142
      %v144 = vrcp.pop %v130
      %v145 = vmul.f32 %v25, %v144
      %v146 = vrcp.pop %v131
      %v147 = vmul.f32 %v26, %v146
      %v148 = vld [vmem:[%s1] sm:$0x1]
      %v150 = vlaneseq
      %v151 = vshrl.u32 %v150, 7
      %v152 = vsub.s32 0, %v151
      %v153 = vrot.slane %v148, %v152
      %v155 = vmul.f32 %v133, %v153
      %v156 = vmul.f32 %v135, %v153
      %v157 = vmul.f32 %v137, %v153
      %v158 = vmul.f32 %v139, %v153
      %v159 = vmul.f32 %v141, %v153
      %v160 = vmul.f32 %v143, %v153
      %v161 = vmul.f32 %v145, %v153
      %v162 = vmul.f32 %v147, %v153
      %163 = vst.msk [vmem:[#allocation2] sm:$0xff] %vm35, %v155
      %164 = vst.msk [vmem:[#allocation2 + $0x8] sm:$0xff] %vm35, %v156
      %165 = vst.msk [vmem:[#allocation2 + $0x10] sm:$0xff] %vm35, %v157
      %166 = vst.msk [vmem:[#allocation2 + $0x18] sm:$0xff] %vm35, %v158
      %167 = vst.msk [vmem:[#allocation2 + $0x20] sm:$0xff] %vm35, %v159
      %168 = vst.msk [vmem:[#allocation2 + $0x28] sm:$0xff] %vm35, %v160
      %169 = vst.msk [vmem:[#allocation2 + $0x30] sm:$0xff] %vm35, %v161
      %170 = vst.msk [vmem:[#allocation2 + $0x38] sm:$0xff] %vm35, %v162
    $region17: #{tpu_custom_call.1} parent=1 // pred_fallthru
      _
    %v171 = vld [vmem:[#allocation2] sm:$0xff]
    %v172 = vld [vmem:[#allocation2 + $0x8] sm:$0xff]
    %v173 = vld [vmem:[#allocation2 + $0x10] sm:$0xff]
    %v174 = vld [vmem:[#allocation2 + $0x18] sm:$0xff]
    %v175 = vld [vmem:[#allocation2 + $0x20] sm:$0xff]
    %v176 = vld [vmem:[#allocation2 + $0x28] sm:$0xff]
    %v177 = vld [vmem:[#allocation2 + $0x30] sm:$0xff]
    %v178 = vld [vmem:[#allocation2 + $0x38] sm:$0xff]
    %v179 = vld [vmem:[%s2] sm:$0xff]
    %v180 = vld [vmem:[%s2 + $0x8] sm:$0xff]
    %v181 = vld [vmem:[%s2 + $0x10] sm:$0xff]
    %v182 = vld [vmem:[%s2 + $0x18] sm:$0xff]
    %vm183 = vcmask 261120
    %v185 = vsel %vm183, %v171, 0
    %v188 = vsel %vm183, %v172, 0
    %v191 = vsel %vm183, %v173, 0
    %v194 = vsel %vm183, %v174, 0
    %v197 = vsel %vm183, %v175, 0
    %v200 = vsel %vm183, %v176, 0
    %v203 = vsel %vm183, %v177, 0
    %v206 = vsel %vm183, %v178, 0
    %208 = vmatprep.subr.mxu0 0.0
    %209 = vmatpush1.msra.mxu0 0.0
    %210 = vmatprep.subr.mxu0 0.0
    %211 = vmatpush1.msra.mxu0 0.0
    %212 = vmatprep.subr.mxu0 0.0
    %213 = vmatpush1.msra.mxu0 0.0
    %214 = vmatprep.subr.mxu0 0.0
    %215 = vmatpush1.msra.mxu0 0.0
    %216 = vmatprep.subr.mxu0 0.0
    %217 = vmatpush1.msra.mxu0 0.0
    %218 = vmatprep.subr.mxu0 0.0
    %219 = vmatpush1.msra.mxu0 0.0
    %220 = vmatprep.subr.mxu0 0.0
    %221 = vmatpush1.msra.mxu0 0.0
    %222 = vmatprep.subr.mxu0 0.0
    %223 = vmatpush1.msra.mxu0 0.0
    %224 = vmatprep.subr.mxu0 0.0
    %225 = vmatpush1.msra.mxu0 0.0
    %226 = vmatprep.subr.mxu0 0.0
    %227 = vmatpush1.msra.mxu0 0.0
    %228 = vmatprep.subr.mxu0 0.0
    %229 = vmatpush1.msra.mxu0 0.0
    %230 = vmatprep.subr.mxu0 0.0
    %231 = vmatpush1.msra.mxu0 0.0
    %232 = vmatprep.subr.mxu0 0.0
    %v233 = vand.u32 %v182, 4294901760
    %234 = vmatpush1.msra.mxu0 %v233
    %235 = vmatprep.subr.mxu0 0.0
    %v236 = vand.u32 %v181, 4294901760
    %237 = vmatpush1.msra.mxu0 %v236
    %238 = vmatprep.subr.mxu0 0.0
    %v239 = vand.u32 %v180, 4294901760
    %240 = vmatpush1.msra.mxu0 %v239
    %241 = vmatprep.subr.mxu0 0.0
    %v242 = vand.u32 %v179, 4294901760
    %243 = vmatpush1.msra.mxu0 %v242
    %244 = vmatprep.subr.mxu0 0.0
    %245 = vmatpush2.msra.mxu0 0.0
    %246 = vmatprep.subr.mxu0 0.0
    %247 = vmatpush2.msra.mxu0 0.0
    %248 = vmatprep.subr.mxu0 0.0
    %249 = vmatpush2.msra.mxu0 0.0
    %250 = vmatprep.subr.mxu0 0.0
    %251 = vmatpush2.msra.mxu0 0.0
    %252 = vmatprep.subr.mxu0 0.0
    %253 = vmatpush2.msra.mxu0 0.0
    %254 = vmatprep.subr.mxu0 0.0
    %255 = vmatpush2.msra.mxu0 0.0
    %256 = vmatprep.subr.mxu0 0.0
    %257 = vmatpush2.msra.mxu0 0.0
    %258 = vmatprep.subr.mxu0 0.0
    %259 = vmatpush2.msra.mxu0 0.0
    %260 = vmatprep.subr.mxu0 0.0
    %261 = vmatpush2.msra.mxu0 0.0
    %262 = vmatprep.subr.mxu0 0.0
    %263 = vmatpush2.msra.mxu0 0.0
    %264 = vmatprep.subr.mxu0 0.0
    %265 = vmatpush2.msra.mxu0 0.0
    %266 = vmatprep.subr.mxu0 0.0
    %267 = vmatpush2.msra.mxu0 0.0
    %268 = vmatprep.subr.mxu0 0.0
    %269 = vmatpush2.msra.mxu0 0.0
    %270 = vmatprep.subr.mxu0 0.0
    %271 = vmatpush2.msra.mxu0 0.0
    %272 = vmatprep.subr.mxu0 0.0
    %273 = vmatpush2.msra.mxu0 0.0
    %274 = vmatprep.subr.mxu0 0.0
    %275 = vmatpush2.msra.mxu0 0.0
    %276 = vmatprep.mubr.f32.mxu0 0.0
    %v277 = vand.u32 %v185, 4294901760
    %v278 = vsub.f32 %v185, %v277
    %v279 = vand.u32 %v278, 4294901760
    %v280 = vsub.f32 %v278, %v279
    %v281 = vand.u32 %v280, 4294901760
    %282 = vmatmul.mubr.f32.gmra.mxu0 %v281
    %v283 = vpop.f32.mrf.mxu0
    %v284 = vadd.f32 0.0, %v283
    %v285 = vpop.f32.mrf.mxu0
    %286 = vmatprep.mubr.f32.mxu0 0.0
    %v287 = vand.u32 %v188, 4294901760
    %v288 = vsub.f32 %v188, %v287
    %v289 = vand.u32 %v288, 4294901760
    %v290 = vsub.f32 %v288, %v289
    %v291 = vand.u32 %v290, 4294901760
    %292 = vmatmul.mubr.f32.gmra.mxu0 %v291
    %v293 = vpop.f32.mrf.mxu0
    %v294 = vadd.f32 0.0, %v293
    %v295 = vpop.f32.mrf.mxu0
    %296 = vmatprep.mubr.f32.mxu0 0.0
    %v297 = vand.u32 %v191, 4294901760
    %v298 = vsub.f32 %v191, %v297
    %v299 = vand.u32 %v298, 4294901760
    %v300 = vsub.f32 %v298, %v299
    %v301 = vand.u32 %v300, 4294901760
    %302 = vmatmul.mubr.f32.gmra.mxu0 %v301
    %v303 = vpop.f32.mrf.mxu0
    %v304 = vadd.f32 0.0, %v303
    %v305 = vpop.f32.mrf.mxu0
    %306 = vmatprep.mubr.f32.mxu0 0.0
    %v307 = vand.u32 %v194, 4294901760
    %v308 = vsub.f32 %v194, %v307
    %v309 = vand.u32 %v308, 4294901760
    %v310 = vsub.f32 %v308, %v309
    %v311 = vand.u32 %v310, 4294901760
    %312 = vmatmul.mubr.f32.gmra.mxu0 %v311
    %v313 = vpop.f32.mrf.mxu0
    %v314 = vadd.f32 0.0, %v313
    %v315 = vpop.f32.mrf.mxu0
    %316 = vmatprep.mubr.f32.mxu0 0.0
    %v317 = vand.u32 %v197, 4294901760
    %v318 = vsub.f32 %v197, %v317
    %v319 = vand.u32 %v318, 4294901760
    %v320 = vsub.f32 %v318, %v319
    %v321 = vand.u32 %v320, 4294901760
    %322 = vmatmul.mubr.f32.gmra.mxu0 %v321
    %v323 = vpop.f32.mrf.mxu0
    %v324 = vadd.f32 0.0, %v323
    %v325 = vpop.f32.mrf.mxu0
    %326 = vmatprep.mubr.f32.mxu0 0.0
    %v327 = vand.u32 %v200, 4294901760
    %v328 = vsub.f32 %v200, %v327
    %v329 = vand.u32 %v328, 4294901760
    %v330 = vsub.f32 %v328, %v329
    %v331 = vand.u32 %v330, 4294901760
    %332 = vmatmul.mubr.f32.gmra.mxu0 %v331
    %v333 = vpop.f32.mrf.mxu0
    %v334 = vadd.f32 0.0, %v333
    %v335 = vpop.f32.mrf.mxu0
    %336 = vmatprep.mubr.f32.mxu0 0.0
    %v337 = vand.u32 %v203, 4294901760
    %v338 = vsub.f32 %v203, %v337
    %v339 = vand.u32 %v338, 4294901760
    %v340 = vsub.f32 %v338, %v339
    %v341 = vand.u32 %v340, 4294901760
    %342 = vmatmul.mubr.f32.gmra.mxu0 %v341
    %v343 = vpop.f32.mrf.mxu0
    %v344 = vadd.f32 0.0, %v343
    %v345 = vpop.f32.mrf.mxu0
    %346 = vmatprep.mubr.f32.mxu0 0.0
    %v347 = vand.u32 %v206, 4294901760
    %v348 = vsub.f32 %v206, %v347
    %v349 = vand.u32 %v348, 4294901760
    %v350 = vsub.f32 %v348, %v349
    %v351 = vand.u32 %v350, 4294901760
    %352 = vmatmul.mubr.f32.gmra.mxu0 %v351
    %v353 = vpop.f32.mrf.mxu0
    %v354 = vadd.f32 0.0, %v353
    %v355 = vpop.f32.mrf.mxu0
    %356 = vdwg.mxu0
    %357 = vmatprep.subr.mxu0 0.0
    %358 = vmatpush1.msra.mxu0 0.0
    %359 = vmatprep.subr.mxu0 0.0
    %360 = vmatpush1.msra.mxu0 0.0
    %361 = vmatprep.subr.mxu0 0.0
    %362 = vmatpush1.msra.mxu0 0.0
    %363 = vmatprep.subr.mxu0 0.0
    %364 = vmatpush1.msra.mxu0 0.0
    %365 = vmatprep.subr.mxu0 0.0
    %366 = vmatpush1.msra.mxu0 0.0
    %367 = vmatprep.subr.mxu0 0.0
    %368 = vmatpush1.msra.mxu0 0.0
    %369 = vmatprep.subr.mxu0 0.0
    %370 = vmatpush1.msra.mxu0 0.0
    %371 = vmatprep.subr.mxu0 0.0
    %372 = vmatpush1.msra.mxu0 0.0
    %373 = vmatprep.subr.mxu0 0.0
    %374 = vmatpush1.msra.mxu0 0.0
    %375 = vmatprep.subr.mxu0 0.0
    %376 = vmatpush1.msra.mxu0 0.0
    %377 = vmatprep.subr.mxu0 0.0
    %378 = vmatpush1.msra.mxu0 0.0
    %379 = vmatprep.subr.mxu0 0.0
    %380 = vmatpush1.msra.mxu0 0.0
    %381 = vmatprep.subr.mxu0 0.0
    %v382 = vand.u32 %v182, 4294901760
    %v383 = vsub.f32 %v182, %v382
    %v384 = vand.u32 %v383, 4294901760
    %v385 = vsub.f32 %v383, %v384
    %v386 = vand.u32 %v385, 4294901760
    %387 = vmatpush1.msra.mxu0 %v386
    %388 = vmatprep.subr.mxu0 0.0
    %v389 = vand.u32 %v181, 4294901760
    %v390 = vsub.f32 %v181, %v389
    %v391 = vand.u32 %v390, 4294901760
    %v392 = vsub.f32 %v390, %v391
    %v393 = vand.u32 %v392, 4294901760
    %394 = vmatpush1.msra.mxu0 %v393
    %395 = vmatprep.subr.mxu0 0.0
    %v396 = vand.u32 %v180, 4294901760
    %v397 = vsub.f32 %v180, %v396
    %v398 = vand.u32 %v397, 4294901760
    %v399 = vsub.f32 %v397, %v398
    %v400 = vand.u32 %v399, 4294901760
    %401 = vmatpush1.msra.mxu0 %v400
    %402 = vmatprep.subr.mxu0 0.0
    %v403 = vand.u32 %v179, 4294901760
    %v404 = vsub.f32 %v179, %v403
    %v405 = vand.u32 %v404, 4294901760
    %v406 = vsub.f32 %v404, %v405
    %v407 = vand.u32 %v406, 4294901760
    %408 = vmatpush1.msra.mxu0 %v407
    %409 = vmatprep.subr.mxu0 0.0
    %410 = vmatpush2.msra.mxu0 0.0
    %411 = vmatprep.subr.mxu0 0.0
    %412 = vmatpush2.msra.mxu0 0.0
    %413 = vmatprep.subr.mxu0 0.0
    %414 = vmatpush2.msra.mxu0 0.0
    %415 = vmatprep.subr.mxu0 0.0
    %416 = vmatpush2.msra.mxu0 0.0
    %417 = vmatprep.subr.mxu0 0.0
    %418 = vmatpush2.msra.mxu0 0.0
    %419 = vmatprep.subr.mxu0 0.0
    %420 = vmatpush2.msra.mxu0 0.0
    %421 = vmatprep.subr.mxu0 0.0
    %422 = vmatpush2.msra.mxu0 0.0
    %423 = vmatprep.subr.mxu0 0.0
    %424 = vmatpush2.msra.mxu0 0.0
    %425 = vmatprep.subr.mxu0 0.0
    %426 = vmatpush2.msra.mxu0 0.0
    %427 = vmatprep.subr.mxu0 0.0
    %428 = vmatpush2.msra.mxu0 0.0
    %429 = vmatprep.subr.mxu0 0.0
    %430 = vmatpush2.msra.mxu0 0.0
    %431 = vmatprep.subr.mxu0 0.0
    %432 = vmatpush2.msra.mxu0 0.0
    %433 = vmatprep.subr.mxu0 0.0
    %434 = vmatpush2.msra.mxu0 0.0
    %435 = vmatprep.subr.mxu0 0.0
    %436 = vmatpush2.msra.mxu0 0.0
    %437 = vmatprep.subr.mxu0 0.0
    %438 = vmatpush2.msra.mxu0 0.0
    %439 = vmatprep.subr.mxu0 0.0
    %440 = vmatpush2.msra.mxu0 0.0
    %441 = vmatprep.mubr.f32.mxu0 0.0
    %v442 = vand.u32 %v185, 4294901760
    %443 = vmatmul.mubr.f32.gmra.mxu0 %v442
    %v444 = vpop.f32.mrf.mxu0
    %v445 = vadd.f32 %v284, %v444
    %v446 = vpop.f32.mrf.mxu0
    %447 = vmatprep.mubr.f32.mxu0 0.0
    %v448 = vand.u32 %v188, 4294901760
    %449 = vmatmul.mubr.f32.gmra.mxu0 %v448
    %v450 = vpop.f32.mrf.mxu0
    %v451 = vadd.f32 %v294, %v450
    %v452 = vpop.f32.mrf.mxu0
    %453 = vmatprep.mubr.f32.mxu0 0.0
    %v454 = vand.u32 %v191, 4294901760
    %455 = vmatmul.mubr.f32.gmra.mxu0 %v454
    %v456 = vpop.f32.mrf.mxu0
    %v457 = vadd.f32 %v304, %v456
    %v458 = vpop.f32.mrf.mxu0
    %459 = vmatprep.mubr.f32.mxu0 0.0
    %v460 = vand.u32 %v194, 4294901760
    %461 = vmatmul.mubr.f32.gmra.mxu0 %v460
    %v462 = vpop.f32.mrf.mxu0
    %v463 = vadd.f32 %v314, %v462
    %v464 = vpop.f32.mrf.mxu0
    %465 = vmatprep.mubr.f32.mxu0 0.0
    %v466 = vand.u32 %v197, 4294901760
    %467 = vmatmul.mubr.f32.gmra.mxu0 %v466
    %v468 = vpop.f32.mrf.mxu0
    %v469 = vadd.f32 %v324, %v468
    %v470 = vpop.f32.mrf.mxu0
    %471 = vmatprep.mubr.f32.mxu0 0.0
    %v472 = vand.u32 %v200, 4294901760
    %473 = vmatmul.mubr.f32.gmra.mxu0 %v472
    %v474 = vpop.f32.mrf.mxu0
    %v475 = vadd.f32 %v334, %v474
    %v476 = vpop.f32.mrf.mxu0
    %477 = vmatprep.mubr.f32.mxu0 0.0
    %v478 = vand.u32 %v203, 4294901760
    %479 = vmatmul.mubr.f32.gmra.mxu0 %v478
    %v480 = vpop.f32.mrf.mxu0
    %v481 = vadd.f32 %v344, %v480
    %v482 = vpop.f32.mrf.mxu0
    %483 = vmatprep.mubr.f32.mxu0 0.0
    %v484 = vand.u32 %v206, 4294901760
    %485 = vmatmul.mubr.f32.gmra.mxu0 %v484
    %v486 = vpop.f32.mrf.mxu0
    %v487 = vadd.f32 %v354, %v486
    %v488 = vpop.f32.mrf.mxu0
    %489 = vdwg.mxu0
    %490 = vmatprep.subr.mxu0 0.0
    %491 = vmatpush1.msra.mxu0 0.0
    %492 = vmatprep.subr.mxu0 0.0
    %493 = vmatpush1.msra.mxu0 0.0
    %494 = vmatprep.subr.mxu0 0.0
    %495 = vmatpush1.msra.mxu0 0.0
    %496 = vmatprep.subr.mxu0 0.0
    %497 = vmatpush1.msra.mxu0 0.0
    %498 = vmatprep.subr.mxu0 0.0
    %499 = vmatpush1.msra.mxu0 0.0
    %500 = vmatprep.subr.mxu0 0.0
    %501 = vmatpush1.msra.mxu0 0.0
    %502 = vmatprep.subr.mxu0 0.0
    %503 = vmatpush1.msra.mxu0 0.0
    %504 = vmatprep.subr.mxu0 0.0
    %505 = vmatpush1.msra.mxu0 0.0
    %506 = vmatprep.subr.mxu0 0.0
    %507 = vmatpush1.msra.mxu0 0.0
    %508 = vmatprep.subr.mxu0 0.0
    %509 = vmatpush1.msra.mxu0 0.0
    %510 = vmatprep.subr.mxu0 0.0
    %511 = vmatpush1.msra.mxu0 0.0
    %512 = vmatprep.subr.mxu0 0.0
    %513 = vmatpush1.msra.mxu0 0.0
    %514 = vmatprep.subr.mxu0 0.0
    %v515 = vand.u32 %v182, 4294901760
    %v516 = vsub.f32 %v182, %v515
    %517 = vmatpush1.msra.mxu0 %v516
    %518 = vmatprep.subr.mxu0 0.0
    %v519 = vand.u32 %v181, 4294901760
    %v520 = vsub.f32 %v181, %v519
    %521 = vmatpush1.msra.mxu0 %v520
    %522 = vmatprep.subr.mxu0 0.0
    %v523 = vand.u32 %v180, 4294901760
    %v524 = vsub.f32 %v180, %v523
    %525 = vmatpush1.msra.mxu0 %v524
    %526 = vmatprep.subr.mxu0 0.0
    %v527 = vand.u32 %v179, 4294901760
    %v528 = vsub.f32 %v179, %v527
    %529 = vmatpush1.msra.mxu0 %v528
    %530 = vmatprep.subr.mxu0 0.0
    %531 = vmatpush2.msra.mxu0 0.0
    %532 = vmatprep.subr.mxu0 0.0
    %533 = vmatpush2.msra.mxu0 0.0
    %534 = vmatprep.subr.mxu0 0.0
    %535 = vmatpush2.msra.mxu0 0.0
    %536 = vmatprep.subr.mxu0 0.0
    %537 = vmatpush2.msra.mxu0 0.0
    %538 = vmatprep.subr.mxu0 0.0
    %539 = vmatpush2.msra.mxu0 0.0
    %540 = vmatprep.subr.mxu0 0.0
    %541 = vmatpush2.msra.mxu0 0.0
    %542 = vmatprep.subr.mxu0 0.0
    %543 = vmatpush2.msra.mxu0 0.0
    %544 = vmatprep.subr.mxu0 0.0
    %545 = vmatpush2.msra.mxu0 0.0
    %546 = vmatprep.subr.mxu0 0.0
    %547 = vmatpush2.msra.mxu0 0.0
    %548 = vmatprep.subr.mxu0 0.0
    %549 = vmatpush2.msra.mxu0 0.0
    %550 = vmatprep.subr.mxu0 0.0
    %551 = vmatpush2.msra.mxu0 0.0
    %552 = vmatprep.subr.mxu0 0.0
    %553 = vmatpush2.msra.mxu0 0.0
    %554 = vmatprep.subr.mxu0 0.0
    %555 = vmatpush2.msra.mxu0 0.0
    %556 = vmatprep.subr.mxu0 0.0
    %557 = vmatpush2.msra.mxu0 0.0
    %558 = vmatprep.subr.mxu0 0.0
    %559 = vmatpush2.msra.mxu0 0.0
    %560 = vmatprep.subr.mxu0 0.0
    %561 = vmatpush2.msra.mxu0 0.0
    %562 = vmatprep.mubr.f32.mxu0 0.0
    %v563 = vand.u32 %v185, 4294901760
    %v564 = vsub.f32 %v185, %v563
    %565 = vmatmul.mubr.f32.gmra.mxu0 %v564
    %v566 = vpop.f32.mrf.mxu0
    %v567 = vadd.f32 %v445, %v566
    %v568 = vpop.f32.mrf.mxu0
    %569 = vmatprep.mubr.f32.mxu0 0.0
    %v570 = vand.u32 %v188, 4294901760
    %v571 = vsub.f32 %v188, %v570
    %572 = vmatmul.mubr.f32.gmra.mxu0 %v571
    %v573 = vpop.f32.mrf.mxu0
    %v574 = vadd.f32 %v451, %v573
    %v575 = vpop.f32.mrf.mxu0
    %576 = vmatprep.mubr.f32.mxu0 0.0
    %v577 = vand.u32 %v191, 4294901760
    %v578 = vsub.f32 %v191, %v577
    %579 = vmatmul.mubr.f32.gmra.mxu0 %v578
    %v580 = vpop.f32.mrf.mxu0
    %v581 = vadd.f32 %v457, %v580
    %v582 = vpop.f32.mrf.mxu0
    %583 = vmatprep.mubr.f32.mxu0 0.0
    %v584 = vand.u32 %v194, 4294901760
    %v585 = vsub.f32 %v194, %v584
    %586 = vmatmul.mubr.f32.gmra.mxu0 %v585
    %v587 = vpop.f32.mrf.mxu0
    %v588 = vadd.f32 %v463, %v587
    %v589 = vpop.f32.mrf.mxu0
    %590 = vmatprep.mubr.f32.mxu0 0.0
    %v591 = vand.u32 %v197, 4294901760
    %v592 = vsub.f32 %v197, %v591
    %593 = vmatmul.mubr.f32.gmra.mxu0 %v592
    %v594 = vpop.f32.mrf.mxu0
    %v595 = vadd.f32 %v469, %v594
    %v596 = vpop.f32.mrf.mxu0
    %597 = vmatprep.mubr.f32.mxu0 0.0
    %v598 = vand.u32 %v200, 4294901760
    %v599 = vsub.f32 %v200, %v598
    %600 = vmatmul.mubr.f32.gmra.mxu0 %v599
    %v601 = vpop.f32.mrf.mxu0
    %v602 = vadd.f32 %v475, %v601
    %v603 = vpop.f32.mrf.mxu0
    %604 = vmatprep.mubr.f32.mxu0 0.0
    %v605 = vand.u32 %v203, 4294901760
    %v606 = vsub.f32 %v203, %v605
    %607 = vmatmul.mubr.f32.gmra.mxu0 %v606
    %v608 = vpop.f32.mrf.mxu0
    %v609 = vadd.f32 %v481, %v608
    %v610 = vpop.f32.mrf.mxu0
    %611 = vmatprep.mubr.f32.mxu0 0.0
    %v612 = vand.u32 %v206, 4294901760
    %v613 = vsub.f32 %v206, %v612
    %614 = vmatmul.mubr.f32.gmra.mxu0 %v613
    %v615 = vpop.f32.mrf.mxu0
    %v616 = vadd.f32 %v487, %v615
    %v617 = vpop.f32.mrf.mxu0
    %618 = vdwg.mxu0
    %619 = vmatprep.subr.mxu0 0.0
    %620 = vmatpush1.msra.mxu0 0.0
    %621 = vmatprep.subr.mxu0 0.0
    %622 = vmatpush1.msra.mxu0 0.0
    %623 = vmatprep.subr.mxu0 0.0
    %624 = vmatpush1.msra.mxu0 0.0
    %625 = vmatprep.subr.mxu0 0.0
    %626 = vmatpush1.msra.mxu0 0.0
    %627 = vmatprep.subr.mxu0 0.0
    %628 = vmatpush1.msra.mxu0 0.0
    %629 = vmatprep.subr.mxu0 0.0
    %630 = vmatpush1.msra.mxu0 0.0
    %631 = vmatprep.subr.mxu0 0.0
    %632 = vmatpush1.msra.mxu0 0.0
    %633 = vmatprep.subr.mxu0 0.0
    %634 = vmatpush1.msra.mxu0 0.0
    %635 = vmatprep.subr.mxu0 0.0
    %636 = vmatpush1.msra.mxu0 0.0
    %637 = vmatprep.subr.mxu0 0.0
    %638 = vmatpush1.msra.mxu0 0.0
    %639 = vmatprep.subr.mxu0 0.0
    %640 = vmatpush1.msra.mxu0 0.0
    %641 = vmatprep.subr.mxu0 0.0
    %642 = vmatpush1.msra.mxu0 0.0
    %643 = vmatprep.subr.mxu0 0.0
    %v644 = vand.u32 %v182, 4294901760
    %645 = vmatpush1.msra.mxu0 %v644
    %646 = vmatprep.subr.mxu0 0.0
    %v647 = vand.u32 %v181, 4294901760
    %648 = vmatpush1.msra.mxu0 %v647
    %649 = vmatprep.subr.mxu0 0.0
    %v650 = vand.u32 %v180, 4294901760
    %651 = vmatpush1.msra.mxu0 %v650
    %652 = vmatprep.subr.mxu0 0.0
    %v653 = vand.u32 %v179, 4294901760
    %654 = vmatpush1.msra.mxu0 %v653
    %655 = vmatprep.subr.mxu0 0.0
    %656 = vmatpush2.msra.mxu0 0.0
    %657 = vmatprep.subr.mxu0 0.0
    %658 = vmatpush2.msra.mxu0 0.0
    %659 = vmatprep.subr.mxu0 0.0
    %660 = vmatpush2.msra.mxu0 0.0
    %661 = vmatprep.subr.mxu0 0.0
    %662 = vmatpush2.msra.mxu0 0.0
    %663 = vmatprep.subr.mxu0 0.0
    %664 = vmatpush2.msra.mxu0 0.0
    %665 = vmatprep.subr.mxu0 0.0
    %666 = vmatpush2.msra.mxu0 0.0
    %667 = vmatprep.subr.mxu0 0.0
    %668 = vmatpush2.msra.mxu0 0.0
    %669 = vmatprep.subr.mxu0 0.0
    %670 = vmatpush2.msra.mxu0 0.0
    %671 = vmatprep.subr.mxu0 0.0
    %672 = vmatpush2.msra.mxu0 0.0
    %673 = vmatprep.subr.mxu0 0.0
    %674 = vmatpush2.msra.mxu0 0.0
    %675 = vmatprep.subr.mxu0 0.0
    %676 = vmatpush2.msra.mxu0 0.0
    %677 = vmatprep.subr.mxu0 0.0
    %678 = vmatpush2.msra.mxu0 0.0
    %679 = vmatprep.subr.mxu0 0.0
    %680 = vmatpush2.msra.mxu0 0.0
    %681 = vmatprep.subr.mxu0 0.0
    %682 = vmatpush2.msra.mxu0 0.0
    %683 = vmatprep.subr.mxu0 0.0
    %684 = vmatpush2.msra.mxu0 0.0
    %685 = vmatprep.subr.mxu0 0.0
    %686 = vmatpush2.msra.mxu0 0.0
    %687 = vmatprep.mubr.f32.mxu0 0.0
    %v688 = vand.u32 %v185, 4294901760
    %v689 = vsub.f32 %v185, %v688
    %v690 = vand.u32 %v689, 4294901760
    %691 = vmatmul.mubr.f32.gmra.mxu0 %v690
    %v692 = vpop.f32.mrf.mxu0
    %v693 = vadd.f32 %v567, %v692
    %v694 = vpop.f32.mrf.mxu0
    %695 = vmatprep.mubr.f32.mxu0 0.0
    %v696 = vand.u32 %v188, 4294901760
    %v697 = vsub.f32 %v188, %v696
    %v698 = vand.u32 %v697, 4294901760
    %699 = vmatmul.mubr.f32.gmra.mxu0 %v698
    %v700 = vpop.f32.mrf.mxu0
    %v701 = vadd.f32 %v574, %v700
    %v702 = vpop.f32.mrf.mxu0
    %703 = vmatprep.mubr.f32.mxu0 0.0
    %v704 = vand.u32 %v191, 4294901760
    %v705 = vsub.f32 %v191, %v704
    %v706 = vand.u32 %v705, 4294901760
    %707 = vmatmul.mubr.f32.gmra.mxu0 %v706
    %v708 = vpop.f32.mrf.mxu0
    %v709 = vadd.f32 %v581, %v708
    %v710 = vpop.f32.mrf.mxu0
    %711 = vmatprep.mubr.f32.mxu0 0.0
    %v712 = vand.u32 %v194, 4294901760
    %v713 = vsub.f32 %v194, %v712
    %v714 = vand.u32 %v713, 4294901760
    %715 = vmatmul.mubr.f32.gmra.mxu0 %v714
    %v716 = vpop.f32.mrf.mxu0
    %v717 = vadd.f32 %v588, %v716
    %v718 = vpop.f32.mrf.mxu0
    %719 = vmatprep.mubr.f32.mxu0 0.0
    %v720 = vand.u32 %v197, 4294901760
    %v721 = vsub.f32 %v197, %v720
    %v722 = vand.u32 %v721, 4294901760
    %723 = vmatmul.mubr.f32.gmra.mxu0 %v722
    %v724 = vpop.f32.mrf.mxu0
    %v725 = vadd.f32 %v595, %v724
    %v726 = vpop.f32.mrf.mxu0
    %727 = vmatprep.mubr.f32.mxu0 0.0
    %v728 = vand.u32 %v200, 4294901760
    %v729 = vsub.f32 %v200, %v728
    %v730 = vand.u32 %v729, 4294901760
    %731 = vmatmul.mubr.f32.gmra.mxu0 %v730
    %v732 = vpop.f32.mrf.mxu0
    %v733 = vadd.f32 %v602, %v732
    %v734 = vpop.f32.mrf.mxu0
    %735 = vmatprep.mubr.f32.mxu0 0.0
    %v736 = vand.u32 %v203, 4294901760
    %v737 = vsub.f32 %v203, %v736
    %v738 = vand.u32 %v737, 4294901760
    %739 = vmatmul.mubr.f32.gmra.mxu0 %v738
    %v740 = vpop.f32.mrf.mxu0
    %v741 = vadd.f32 %v609, %v740
    %v742 = vpop.f32.mrf.mxu0
    %743 = vmatprep.mubr.f32.mxu0 0.0
    %v744 = vand.u32 %v206, 4294901760
    %v745 = vsub.f32 %v206, %v744
    %v746 = vand.u32 %v745, 4294901760
    %747 = vmatmul.mubr.f32.gmra.mxu0 %v746
    %v748 = vpop.f32.mrf.mxu0
    %v749 = vadd.f32 %v616, %v748
    %v750 = vpop.f32.mrf.mxu0
    %751 = vdwg.mxu0
    %752 = vmatprep.subr.mxu0 0.0
    %753 = vmatpush1.msra.mxu0 0.0
    %754 = vmatprep.subr.mxu0 0.0
    %755 = vmatpush1.msra.mxu0 0.0
    %756 = vmatprep.subr.mxu0 0.0
    %757 = vmatpush1.msra.mxu0 0.0
    %758 = vmatprep.subr.mxu0 0.0
    %759 = vmatpush1.msra.mxu0 0.0
    %760 = vmatprep.subr.mxu0 0.0
    %761 = vmatpush1.msra.mxu0 0.0
    %762 = vmatprep.subr.mxu0 0.0
    %763 = vmatpush1.msra.mxu0 0.0
    %764 = vmatprep.subr.mxu0 0.0
    %765 = vmatpush1.msra.mxu0 0.0
    %766 = vmatprep.subr.mxu0 0.0
    %767 = vmatpush1.msra.mxu0 0.0
    %768 = vmatprep.subr.mxu0 0.0
    %769 = vmatpush1.msra.mxu0 0.0
    %770 = vmatprep.subr.mxu0 0.0
    %771 = vmatpush1.msra.mxu0 0.0
    %772 = vmatprep.subr.mxu0 0.0
    %773 = vmatpush1.msra.mxu0 0.0
    %774 = vmatprep.subr.mxu0 0.0
    %775 = vmatpush1.msra.mxu0 0.0
    %776 = vmatprep.subr.mxu0 0.0
    %v777 = vand.u32 %v182, 4294901760
    %v778 = vsub.f32 %v182, %v777
    %v779 = vand.u32 %v778, 4294901760
    %780 = vmatpush1.msra.mxu0 %v779
    %781 = vmatprep.subr.mxu0 0.0
    %v782 = vand.u32 %v181, 4294901760
    %v783 = vsub.f32 %v181, %v782
    %v784 = vand.u32 %v783, 4294901760
    %785 = vmatpush1.msra.mxu0 %v784
    %786 = vmatprep.subr.mxu0 0.0
    %v787 = vand.u32 %v180, 4294901760
    %v788 = vsub.f32 %v180, %v787
    %v789 = vand.u32 %v788, 4294901760
    %790 = vmatpush1.msra.mxu0 %v789
    %791 = vmatprep.subr.mxu0 0.0
    %v792 = vand.u32 %v179, 4294901760
    %v793 = vsub.f32 %v179, %v792
    %v794 = vand.u32 %v793, 4294901760
    %795 = vmatpush1.msra.mxu0 %v794
    %796 = vmatprep.subr.mxu0 0.0
    %797 = vmatpush2.msra.mxu0 0.0
    %798 = vmatprep.subr.mxu0 0.0
    %799 = vmatpush2.msra.mxu0 0.0
    %800 = vmatprep.subr.mxu0 0.0
    %801 = vmatpush2.msra.mxu0 0.0
    %802 = vmatprep.subr.mxu0 0.0
    %803 = vmatpush2.msra.mxu0 0.0
    %804 = vmatprep.subr.mxu0 0.0
    %805 = vmatpush2.msra.mxu0 0.0
    %806 = vmatprep.subr.mxu0 0.0
    %807 = vmatpush2.msra.mxu0 0.0
    %808 = vmatprep.subr.mxu0 0.0
    %809 = vmatpush2.msra.mxu0 0.0
    %810 = vmatprep.subr.mxu0 0.0
    %811 = vmatpush2.msra.mxu0 0.0
    %812 = vmatprep.subr.mxu0 0.0
    %813 = vmatpush2.msra.mxu0 0.0
    %814 = vmatprep.subr.mxu0 0.0
    %815 = vmatpush2.msra.mxu0 0.0
    %816 = vmatprep.subr.mxu0 0.0
    %817 = vmatpush2.msra.mxu0 0.0
    %818 = vmatprep.subr.mxu0 0.0
    %819 = vmatpush2.msra.mxu0 0.0
    %820 = vmatprep.subr.mxu0 0.0
    %821 = vmatpush2.msra.mxu0 0.0
    %822 = vmatprep.subr.mxu0 0.0
    %823 = vmatpush2.msra.mxu0 0.0
    %824 = vmatprep.subr.mxu0 0.0
    %825 = vmatpush2.msra.mxu0 0.0
    %826 = vmatprep.subr.mxu0 0.0
    %827 = vmatpush2.msra.mxu0 0.0
    %828 = vmatprep.mubr.f32.mxu0 0.0
    %v829 = vand.u32 %v185, 4294901760
    %830 = vmatmul.mubr.f32.gmra.mxu0 %v829
    %v831 = vpop.f32.mrf.mxu0
    %v832 = vadd.f32 %v693, %v831
    %v833 = vpop.f32.mrf.mxu0
    %834 = vmatprep.mubr.f32.mxu0 0.0
    %v835 = vand.u32 %v188, 4294901760
    %836 = vmatmul.mubr.f32.gmra.mxu0 %v835
    %v837 = vpop.f32.mrf.mxu0
    %v838 = vadd.f32 %v701, %v837
    %v839 = vpop.f32.mrf.mxu0
    %840 = vmatprep.mubr.f32.mxu0 0.0
    %v841 = vand.u32 %v191, 4294901760
    %842 = vmatmul.mubr.f32.gmra.mxu0 %v841
    %v843 = vpop.f32.mrf.mxu0
    %v844 = vadd.f32 %v709, %v843
    %v845 = vpop.f32.mrf.mxu0
    %846 = vmatprep.mubr.f32.mxu0 0.0
    %v847 = vand.u32 %v194, 4294901760
    %848 = vmatmul.mubr.f32.gmra.mxu0 %v847
    %v849 = vpop.f32.mrf.mxu0
    %v850 = vadd.f32 %v717, %v849
    %v851 = vpop.f32.mrf.mxu0
    %852 = vmatprep.mubr.f32.mxu0 0.0
    %v853 = vand.u32 %v197, 4294901760
    %854 = vmatmul.mubr.f32.gmra.mxu0 %v853
    %v855 = vpop.f32.mrf.mxu0
    %v856 = vadd.f32 %v725, %v855
    %v857 = vpop.f32.mrf.mxu0
    %858 = vmatprep.mubr.f32.mxu0 0.0
    %v859 = vand.u32 %v200, 4294901760
    %860 = vmatmul.mubr.f32.gmra.mxu0 %v859
    %v861 = vpop.f32.mrf.mxu0
    %v862 = vadd.f32 %v733, %v861
    %v863 = vpop.f32.mrf.mxu0
    %864 = vmatprep.mubr.f32.mxu0 0.0
    %v865 = vand.u32 %v203, 4294901760
    %866 = vmatmul.mubr.f32.gmra.mxu0 %v865
    %v867 = vpop.f32.mrf.mxu0
    %v868 = vadd.f32 %v741, %v867
    %v869 = vpop.f32.mrf.mxu0
    %870 = vmatprep.mubr.f32.mxu0 0.0
    %v871 = vand.u32 %v206, 4294901760
    %872 = vmatmul.mubr.f32.gmra.mxu0 %v871
    %v873 = vpop.f32.mrf.mxu0
    %v874 = vadd.f32 %v749, %v873
    %v875 = vpop.f32.mrf.mxu0
    %876 = vdwg.mxu0
    %877 = vmatprep.subr.mxu0 0.0
    %878 = vmatpush1.msra.mxu0 0.0
    %879 = vmatprep.subr.mxu0 0.0
    %880 = vmatpush1.msra.mxu0 0.0
    %881 = vmatprep.subr.mxu0 0.0
    %882 = vmatpush1.msra.mxu0 0.0
    %883 = vmatprep.subr.mxu0 0.0
    %884 = vmatpush1.msra.mxu0 0.0
    %885 = vmatprep.subr.mxu0 0.0
    %886 = vmatpush1.msra.mxu0 0.0
    %887 = vmatprep.subr.mxu0 0.0
    %888 = vmatpush1.msra.mxu0 0.0
    %889 = vmatprep.subr.mxu0 0.0
    %890 = vmatpush1.msra.mxu0 0.0
    %891 = vmatprep.subr.mxu0 0.0
    %892 = vmatpush1.msra.mxu0 0.0
    %893 = vmatprep.subr.mxu0 0.0
    %894 = vmatpush1.msra.mxu0 0.0
    %895 = vmatprep.subr.mxu0 0.0
    %896 = vmatpush1.msra.mxu0 0.0
    %897 = vmatprep.subr.mxu0 0.0
    %898 = vmatpush1.msra.mxu0 0.0
    %899 = vmatprep.subr.mxu0 0.0
    %900 = vmatpush1.msra.mxu0 0.0
    %901 = vmatprep.subr.mxu0 0.0
    %v902 = vand.u32 %v182, 4294901760
    %903 = vmatpush1.msra.mxu0 %v902
    %904 = vmatprep.subr.mxu0 0.0
    %v905 = vand.u32 %v181, 4294901760
    %906 = vmatpush1.msra.mxu0 %v905
    %907 = vmatprep.subr.mxu0 0.0
    %v908 = vand.u32 %v180, 4294901760
    %909 = vmatpush1.msra.mxu0 %v908
    %910 = vmatprep.subr.mxu0 0.0
    %v911 = vand.u32 %v179, 4294901760
    %912 = vmatpush1.msra.mxu0 %v911
    %913 = vmatprep.subr.mxu0 0.0
    %914 = vmatpush2.msra.mxu0 0.0
    %915 = vmatprep.subr.mxu0 0.0
    %916 = vmatpush2.msra.mxu0 0.0
    %917 = vmatprep.subr.mxu0 0.0
    %918 = vmatpush2.msra.mxu0 0.0
    %919 = vmatprep.subr.mxu0 0.0
    %920 = vmatpush2.msra.mxu0 0.0
    %921 = vmatprep.subr.mxu0 0.0
    %922 = vmatpush2.msra.mxu0 0.0
    %923 = vmatprep.subr.mxu0 0.0
    %924 = vmatpush2.msra.mxu0 0.0
    %925 = vmatprep.subr.mxu0 0.0
    %926 = vmatpush2.msra.mxu0 0.0
    %927 = vmatprep.subr.mxu0 0.0
    %928 = vmatpush2.msra.mxu0 0.0
    %929 = vmatprep.subr.mxu0 0.0
    %930 = vmatpush2.msra.mxu0 0.0
    %931 = vmatprep.subr.mxu0 0.0
    %932 = vmatpush2.msra.mxu0 0.0
    %933 = vmatprep.subr.mxu0 0.0
    %934 = vmatpush2.msra.mxu0 0.0
    %935 = vmatprep.subr.mxu0 0.0
    %936 = vmatpush2.msra.mxu0 0.0
    %937 = vmatprep.subr.mxu0 0.0
    %938 = vmatpush2.msra.mxu0 0.0
    %939 = vmatprep.subr.mxu0 0.0
    %940 = vmatpush2.msra.mxu0 0.0
    %941 = vmatprep.subr.mxu0 0.0
    %942 = vmatpush2.msra.mxu0 0.0
    %943 = vmatprep.subr.mxu0 0.0
    %944 = vmatpush2.msra.mxu0 0.0
    %945 = vmatprep.mubr.f32.mxu0 0.0
    %v946 = vand.u32 %v185, 4294901760
    %947 = vmatmul.mubr.f32.gmra.mxu0 %v946
    %v948 = vpop.f32.mrf.mxu0
    %v949 = vadd.f32 %v832, %v948
    %v950 = vpop.f32.mrf.mxu0
    %951 = vmatprep.mubr.f32.mxu0 0.0
    %v952 = vand.u32 %v188, 4294901760
    %953 = vmatmul.mubr.f32.gmra.mxu0 %v952
    %v954 = vpop.f32.mrf.mxu0
    %v955 = vadd.f32 %v838, %v954
    %v956 = vpop.f32.mrf.mxu0
    %957 = vmatprep.mubr.f32.mxu0 0.0
    %v958 = vand.u32 %v191, 4294901760
    %959 = vmatmul.mubr.f32.gmra.mxu0 %v958
    %v960 = vpop.f32.mrf.mxu0
    %v961 = vadd.f32 %v844, %v960
    %v962 = vpop.f32.mrf.mxu0
    %963 = vmatprep.mubr.f32.mxu0 0.0
    %v964 = vand.u32 %v194, 4294901760
    %965 = vmatmul.mubr.f32.gmra.mxu0 %v964
    %v966 = vpop.f32.mrf.mxu0
    %v967 = vadd.f32 %v850, %v966
    %v968 = vpop.f32.mrf.mxu0
    %969 = vmatprep.mubr.f32.mxu0 0.0
    %v970 = vand.u32 %v197, 4294901760
    %971 = vmatmul.mubr.f32.gmra.mxu0 %v970
    %v972 = vpop.f32.mrf.mxu0
    %v973 = vadd.f32 %v856, %v972
    %v974 = vpop.f32.mrf.mxu0
    %975 = vmatprep.mubr.f32.mxu0 0.0
    %v976 = vand.u32 %v200, 4294901760
    %977 = vmatmul.mubr.f32.gmra.mxu0 %v976
    %v978 = vpop.f32.mrf.mxu0
    %v979 = vadd.f32 %v862, %v978
    %v980 = vpop.f32.mrf.mxu0
    %981 = vmatprep.mubr.f32.mxu0 0.0
    %v982 = vand.u32 %v203, 4294901760
    %983 = vmatmul.mubr.f32.gmra.mxu0 %v982
    %v984 = vpop.f32.mrf.mxu0
    %v985 = vadd.f32 %v868, %v984
    %v986 = vpop.f32.mrf.mxu0
    %987 = vmatprep.mubr.f32.mxu0 0.0
    %v988 = vand.u32 %v206, 4294901760
    %989 = vmatmul.mubr.f32.gmra.mxu0 %v988
    %v990 = vpop.f32.mrf.mxu0
    %v991 = vadd.f32 %v874, %v990
    %v992 = vpop.f32.mrf.mxu0
    %993 = vdwg.mxu0
    %vm994 = vcmask 785408
    %995 = vst.msk [vmem:[#allocation3] sm:$0xff] %vm994, %v949
    %996 = vst.msk [vmem:[#allocation3 + $0x8] sm:$0xff] %vm994, %v955
    %997 = vst.msk [vmem:[#allocation3 + $0x10] sm:$0xff] %vm994, %v961
    %998 = vst.msk [vmem:[#allocation3 + $0x18] sm:$0xff] %vm994, %v967
    %999 = vst.msk [vmem:[#allocation3 + $0x20] sm:$0xff] %vm994, %v973
    %1000 = vst.msk [vmem:[#allocation3 + $0x28] sm:$0xff] %vm994, %v979
    %1001 = vst.msk [vmem:[#allocation3 + $0x30] sm:$0xff] %vm994, %v985
    %1002 = vst.msk [vmem:[#allocation3 + $0x38] sm:$0xff] %vm994, %v991
    // Predicated region
    $region18: #{tpu_custom_call.1} parent=1 // pred_check
      _
    $region19: #{tpu_custom_call.1} parent=1 // pred_check_branch
      %1004 = sbr.rel (0) target = $region21
    $region20: #{tpu_custom_call.1} parent=1 // pred_region
      %s1006 = ssub.s32 1024, 1024
      %1007 = vsyncadd [#allocation4], %s1006
      %s1008 = sshll.u32 [#allocation3], 4
      %s1009 = int_to_ptr.vmem [resolvable:$true] %s1008
      %1014 = dma.vmem_to_hbm [thread:$0]  %s1009, 1024, %s3, [#allocation4], 128, 128, 8
    $region21: #{tpu_custom_call.1} parent=1 // pred_fallthru
      _
    // Predicated region
    $region22: #{tpu_custom_call.1} parent=1 // pred_check
      _
    $region23: #{tpu_custom_call.1} parent=1 // pred_check_branch
      %1016 = sbr.rel (0) target = $region25
    $region24: #{tpu_custom_call.1} parent=1 // pred_region
      %1017 = dma.done [#allocation4], 1024
    $region25: #{tpu_custom_call.1} parent=1 // pred_fallthru
      _
    %1018 = vsyncpa [#allocation4], 1

</llo_original>
